<compile_context>
chip_gen: v6e
topology: v6e:2x2x1
jax: 0.10.0
libtpu: 0.0.40
codegen_flags: <defaults>
</compile_context>

<pallas_src>
import jax
import jax.numpy as jnp
from jax.experimental import pallas as pl
from jax.experimental.pallas import tpu as pltpu


def w2w_kernel(x_ref, w1t_ref, w2t_ref, o_ref):
    # x_ref:   (TB, input_dim)       f32   VMEM (pipelined per grid step)
    # w1t_ref: (input_dim, hidden)   bf16  VMEM (resident across grid steps)
    # w2t_ref: (hidden, input_dim)   bf16  VMEM (resident across grid steps)
    # o_ref:   (TB, input_dim)       f32/bf16 VMEM

    # Cast x to bf16 in-register (full-rate MXU operands on v5e/v6e/v7x).
    # Doing it here avoids a separate un-fused astype pass over x in HBM.
    xb = x_ref[...].astype(jnp.bfloat16)

    # fc1: bf16 x bf16 -> f32 accumulate on the MXU.
    hidden = jnp.dot(xb, w1t_ref[...], preferred_element_type=jnp.float32)

    # fc2: feed bf16 operands again (intentional extra rounding of `hidden`
    # for full MXU rate; covered by the validation tolerances below).
    logits = jnp.dot(hidden.astype(jnp.bfloat16), w2t_ref[...],
                     preferred_element_type=jnp.float32)

    # Numerically stable softmax over the last dim, all in f32.
    # Exact division: denom is only (TB, 1) elements, so this is free and
    # keeps row sums at 1 to f32 precision.
    m = jnp.max(logits, axis=-1, keepdims=True)
    e = jnp.exp(logits - m)
    denom = jnp.sum(e, axis=-1, keepdims=True)
    o_ref[...] = (e / denom).astype(o_ref.dtype)


def prepare_weights(w_fc1, w_fc2):
    """Done ONCE at weight-load time (hoisted out of the per-call path):
    transpose to (in_features, out_features) and cast to bf16 for the MXU.

    w_fc1: (hidden_dim, input_dim)  -- fc1.weight
    w_fc2: (input_dim, hidden_dim)  -- fc2.weight
    """
    w1t = jnp.asarray(w_fc1.T, dtype=jnp.bfloat16)   # (input_dim, hidden_dim)
    w2t = jnp.asarray(w_fc2.T, dtype=jnp.bfloat16)   # (hidden_dim, input_dim)
    return w1t, w2t


def _pick_batch_tile(batch, max_tb=512):
    """Largest batch tile <= max_tb that still gives >= 2 grid steps
    (so v7x's 2 TensorCores both get work); rows kept a multiple of 8."""
    half = -(-batch // 2)                     # ceil(batch / 2)
    tb = min(max_tb, ((half + 7) // 8) * 8)   # round up to sublane multiple
    return max(tb, 8)


def word2word_forward(x, w1t, w2t, *, tb=None, out_dtype=jnp.float32):
    """x: (B, input_dim) float32; w1t/w2t: prepared (transposed, bf16) weights."""
    B, input_dim = x.shape
    hidden_dim = w1t.shape[1]
    assert w1t.shape == (input_dim, hidden_dim)
    assert w2t.shape == (hidden_dim, input_dim)

    if tb is None:
        tb = _pick_batch_tile(B)
    num_tiles = pl.cdiv(B, tb)

    # No explicit padding / slicing: Pallas handles a ragged last tile (input
    # over-read is confined to rows that are never written back).
    return pl.pallas_call(
        w2w_kernel,
        out_shape=jax.ShapeDtypeStruct((B, input_dim), out_dtype),
        grid_spec=pltpu.PrefetchScalarGridSpec(
            num_scalar_prefetch=0,
            grid=(num_tiles,),
            in_specs=[
                # x: one (tb, V) tile per grid step -> double-buffered DMA.
                pl.BlockSpec((tb, input_dim), lambda i: (i, 0)),
                # Weights: same block every step -> DMA'd once, VMEM-resident.
                pl.BlockSpec((input_dim, hidden_dim), lambda i: (0, 0)),
                pl.BlockSpec((hidden_dim, input_dim), lambda i: (0, 0)),
            ],
            out_specs=pl.BlockSpec((tb, input_dim), lambda i: (i, 0)),
        ),
        compiler_params=pltpu.CompilerParams(
            dimension_semantics=("parallel",)),   # batch axis -> v7x megacore
    )(x, w1t, w2t)


def _reference_f32(x, w_fc1, w_fc2):
    hidden = x @ w_fc1.T
    logits = hidden @ w_fc2.T
    return jax.nn.softmax(logits, axis=-1)


def _reference_bf16(x, w1t, w2t):
    # Mirrors the kernel's bf16 operand rounding with f32 accumulation.
    xb = x.astype(jnp.bfloat16).astype(jnp.float32)
    hidden = xb @ w1t.astype(jnp.float32)
    logits = hidden.astype(jnp.bfloat16).astype(jnp.float32) @ w2t.astype(jnp.float32)
    return jax.nn.softmax(logits, axis=-1)


if __name__ == "__main__":
    # Small shapes consistent with the module: vocab (input_dim)=128,
    # hidden (embedding)=32.  Batch=256 -> tb=128, 2 grid steps, so the batch
    # tiling (and v7x 2-core split) is actually exercised.
    B, INPUT_DIM, HIDDEN_DIM = 256, 128, 32

    key = jax.random.PRNGKey(0)
    kx, k1, k2 = jax.random.split(key, 3)

    # One-hot inputs like word2vec training data (deterministic).
    idx = jax.random.randint(kx, (B,), 0, INPUT_DIM)
    x = jax.nn.one_hot(idx, INPUT_DIM, dtype=jnp.float32)

    # Deterministic parameter init, nn.Linear-style uniform(-1/sqrt(fan_in), ...).
    bound1 = 1.0 / (INPUT_DIM ** 0.5)
    bound2 = 1.0 / (HIDDEN_DIM ** 0.5)
    w_fc1 = jax.random.uniform(k1, (HIDDEN_DIM, INPUT_DIM), jnp.float32,
                               -bound1, bound1)   # fc1.weight
    w_fc2 = jax.random.uniform(k2, (INPUT_DIM, HIDDEN_DIM), jnp.float32,
                               -bound2, bound2)   # fc2.weight

    # Weight prep happens once (transpose + bf16 cast hoisted out of forward).
    w1t, w2t = prepare_weights(w_fc1, w_fc2)

    # --- f32-output path (matches PyTorch module semantics) ---
    out = jax.block_until_ready(word2word_forward(x, w1t, w2t))
    assert out.shape == (B, INPUT_DIM)
    assert out.dtype == jnp.float32

    # Tight check vs. a reference that mirrors the kernel's bf16 operands.
    ref_bf16 = _reference_bf16(x, w1t, w2t)
    assert jnp.allclose(out, ref_bf16, atol=2e-3, rtol=0), "mismatch vs bf16 reference"

    # Semantics check vs. the full-f32 PyTorch-equivalent reference.
    ref_f32 = _reference_f32(x, w_fc1, w_fc2)
    assert jnp.allclose(out, ref_f32, atol=5e-3, rtol=0), "mismatch vs f32 reference"

    # Exact division -> rows sum to 1 to f32 precision.
    assert jnp.allclose(jnp.sum(out, axis=-1), 1.0, atol=1e-4), \
        "softmax rows must sum to 1"

    # --- bf16-output path (halves the dominant HBM writeback traffic) ---
    out_bf16 = jax.block_until_ready(
        word2word_forward(x, w1t, w2t, out_dtype=jnp.bfloat16))
    assert out_bf16.shape == (B, INPUT_DIM)
    assert out_bf16.dtype == jnp.bfloat16
    out_bf16_f32 = out_bf16.astype(jnp.float32)
    assert jnp.allclose(out_bf16_f32, out, atol=5e-3, rtol=0), \
        "bf16 output deviates from f32 output"
    assert jnp.allclose(jnp.sum(out_bf16_f32, axis=-1), 1.0, atol=5e-3), \
        "bf16 softmax rows must sum to ~1"

    print("KERNEL_OK")
</pallas_src>

<mosaic_0001>
module attributes {stable_mosaic.version = 11 : i64} {
  func.func @w2w_kernel(%arg0: i32, %arg1: memref<128x128xf32, #tpu.memory_space<vmem>>, %arg2: memref<128x32xbf16, #tpu.memory_space<vmem>>, %arg3: memref<32x128xbf16, #tpu.memory_space<vmem>>, %arg4: memref<128x128xf32, #tpu.memory_space<vmem>>) attributes {dimension_semantics = [#tpu.dimension_semantics<parallel>], iteration_bounds = array<i64: 2>, scalar_prefetch = 0 : i64, scratch_operands = 0 : i64, tpu.core_type = #tpu.core_type<tc>, window_params = [{transform_indices = @transform_0, window_bounds = array<i64: 128, 128>}, {pipeline_mode = #tpu.pipeline_mode<synchronous>, transform_indices = @transform_1, window_bounds = array<i64: 128, 32>}, {pipeline_mode = #tpu.pipeline_mode<synchronous>, transform_indices = @transform_2, window_bounds = array<i64: 32, 128>}, {transform_indices = @transform_3, window_bounds = array<i64: 128, 128>}]} {
    %c0 = arith.constant 0 : index
    %c0_0 = arith.constant 0 : index
    %0 = vector.load %arg1[%c0, %c0_0] : memref<128x128xf32, #tpu.memory_space<vmem>>, vector<128x128xf32>
    %1 = arith.truncf %0 : vector<128x128xf32> to vector<128x128xbf16>
    %c0_1 = arith.constant 0 : index
    %c0_2 = arith.constant 0 : index
    %2 = vector.load %arg2[%c0_1, %c0_2] : memref<128x32xbf16, #tpu.memory_space<vmem>>, vector<128x32xbf16>
    %cst = arith.constant dense<0.000000e+00> : vector<128x32xf32>
    %3 = tpu.matmul %1, %2, %cst {dimension_numbers = #tpu.dot_dimension_numbers<[1], [0], [0], [1], [0, 0, 1, 1], [], []>} : vector<128x128xbf16>, vector<128x32xbf16>, vector<128x32xf32> -> vector<128x32xf32>
    %4 = arith.truncf %3 : vector<128x32xf32> to vector<128x32xbf16>
    %c0_3 = arith.constant 0 : index
    %c0_4 = arith.constant 0 : index
    %5 = vector.load %arg3[%c0_3, %c0_4] : memref<32x128xbf16, #tpu.memory_space<vmem>>, vector<32x128xbf16>
    %cst_5 = arith.constant dense<0.000000e+00> : vector<128x128xf32>
    %6 = tpu.matmul %4, %5, %cst_5 {dimension_numbers = #tpu.dot_dimension_numbers<[1], [0], [0], [1], [0, 0, 1, 1], [], []>} : vector<128x32xbf16>, vector<32x128xbf16>, vector<128x128xf32> -> vector<128x128xf32>
    %cst_6 = arith.constant dense<0xFF800000> : vector<128xf32>
    %7 = vector.multi_reduction <maximumf>, %6, %cst_6 [1] : vector<128x128xf32> to vector<128xf32>
    %8 = vector.shape_cast %7 : vector<128xf32> to vector<128x1xf32>
    %9 = vector.broadcast %8 : vector<128x1xf32> to vector<128x128xf32>
    %10 = arith.subf %6, %9 : vector<128x128xf32>
    %11 = math.exp %10 : vector<128x128xf32>
    %cst_7 = arith.constant dense<0.000000e+00> : vector<128xf32>
    %12 = vector.multi_reduction <add>, %11, %cst_7 [1] : vector<128x128xf32> to vector<128xf32>
    %13 = vector.shape_cast %12 : vector<128xf32> to vector<128x1xf32>
    %14 = vector.broadcast %13 : vector<128x1xf32> to vector<128x128xf32>
    %15 = arith.divf %11, %14 : vector<128x128xf32>
    %c0_8 = arith.constant 0 : index
    %c0_9 = arith.constant 0 : index
    %16 = vector.load %arg4[%c0_8, %c0_9] : memref<128x128xf32, #tpu.memory_space<vmem>>, vector<128x128xf32>
    tpu.vector_store %arg4[%c0_8, %c0_9], %15 {strides = array<i32>} : memref<128x128xf32, #tpu.memory_space<vmem>>, vector<128x128xf32>,
    return
  }
  func.func @transform_0(%arg0: i32) -> (i32, i32) {
    %c0_i32 = arith.constant 0 : i32
    %c0_i32_0 = arith.constant 0 : i32
    return %arg0, %c0_i32 : i32, i32
  }
  func.func @transform_1(%arg0: i32) -> (i32, i32) {
    %c0_i32 = arith.constant 0 : i32
    %c0_i32_0 = arith.constant 0 : i32
    %c0_i32_1 = arith.constant 0 : i32
    return %c0_i32, %c0_i32_0 : i32, i32
  }
  func.func @transform_2(%arg0: i32) -> (i32, i32) {
    %c0_i32 = arith.constant 0 : i32
    %c0_i32_0 = arith.constant 0 : i32
    %c0_i32_1 = arith.constant 0 : i32
    return %c0_i32, %c0_i32_0 : i32, i32
  }
  func.func @transform_3(%arg0: i32) -> (i32, i32) {
    %c0_i32 = arith.constant 0 : i32
    %c0_i32_0 = arith.constant 0 : i32
    return %arg0, %c0_i32 : i32, i32
  }
}

</mosaic_0001>

<llo_original>
// kernel: tpu_custom_call.1
$region0: #{tpu_custom_call.1}
  #allocation0 [shape = 'u32[]', space=smem, size = 0x4, offset = 0x4, fixed_abs, tag = 'smem constant byte address 0x4 - core index']
  #allocation1 [shape = 'u32[144,128]{1,0:T(1,128)}', space=vmem, size = 0x12000, scoped, tag = 'internal scratch']
  %s0 = inlined_call_operand.hbm [shape: f32[256,128], index: 0, kind: input, shape index: {}]
  %s1 = inlined_call_operand.vmem [shape: bf16[128,32], index: 1, kind: input, shape index: {}]
  %s2 = inlined_call_operand.vmem [shape: bf16[32,128], index: 2, kind: input, shape index: {}]
  %s3 = inlined_call_operand.hbm [shape: f32[256,128], index: 3, kind: output, shape index: {}]
  %s4 = sld [smem:[#allocation0]]
  $region49: #{tpu_custom_call.1} parent=0
    _
  %s6 = ssub.s32 1, %s4
  %s7 = scalar_select 0, %s6, %s4
  $region1: #{tpu_custom_call.1} parent=0
    #allocation2 [shape = 'u8[131072]{0}', space=vmem, size = 0x20000, scoped, tag = 'input window, operand 0']
    #allocation3 [shape = 's32[2]{0}', space=sflag, size = 0x8, scoped, tag = 'scoped memory for tpu_custom_call.1']
    #allocation4 [shape = 's32[2]{0}', space=sflag, size = 0x8, scoped, tag = 'scoped memory for tpu_custom_call.1']
    #allocation5 [shape = 'u8[131072]{0}', space=vmem, size = 0x20000, scoped, tag = 'output window, operand 0']
    %8 = vsyncpa [#allocation3], 0
    %s9 = scalar_lea.sflag [#allocation3], 1
    %10 = vsyncpa %s9, 0
    %11 = vsyncpa [#allocation4], 0
    %s12 = scalar_lea.sflag [#allocation4], 1
    %13 = vsyncpa %s12, 0
    loop: start=0, step=1, limit=4
    $region2: #{tpu_custom_call.1} parent=1 // loop_pre_header
      _
    $region3: #{tpu_custom_call.1} parent=1 // loop_header
      %s15 = sphi 0, %s19
      %p16 = scmp.ge.s32.totalorder %s15, 4
      %s25 = sphi 0, %s27
      %s28 = sphi 0, %s25
      %s29 = sphi 0, %s28
      %s45 = sphi 0, %s29
      %s49 = sphi 0, %s49
      %s51 = sphi 0, %s49
      %s52 = sphi 0, %s51
      %s66 = sphi 0, %s52
      %s70 = sphi 0, %s70
      %s72 = sphi 0, %s70
      %s73 = sphi 0, %s72
      %s87 = sphi 0, %s73
      %s93 = sphi 0, %s95
      %s96 = sphi 0, %s93
      %s97 = sphi 0, %s96
      %s113 = sphi 0, %s97
    $region4: #{tpu_custom_call.1} parent=1 // loop_header_branch
      %18 = sbr.rel (%p16) target = $region8
    $region5: #{tpu_custom_call.1} parent=1 // loop_body
      %s20 = ssub.s32 %s15, 1
      %s21 = ssub.s32 %s15, 2
      %s22 = sadd.s32 %s15, 1
      %s23 = ssub.s32 %s15, %s22
      %p24 = scmp.eq.s32.totalorder %s23, 0
      %s26 = sadd.s32 %s25, 1
      %s27 = scalar_select %p24, %s25, %s26
      %p30 = pneg %p24
      %p31 = scmp.eq.s32.totalorder %s15, 1
      %p32 = por %p30, %p31
      %p33 = scmp.ne.s32.totalorder %s25, %s28
      %p34 = scmp.eq.s32.totalorder %s15, 0
      %p35 = por %p33, %p34
      %p36 = scmp.ne.s32.totalorder %s25, %s28
      %p37 = scmp.eq.s32.totalorder %s20, 1
      %p38 = por %p36, %p37
      %p39 = scmp.ne.s32.totalorder %s28, %s29
      %p40 = scmp.eq.s32.totalorder %s20, 0
      %p41 = por %p39, %p40
      %p42 = scmp.ne.s32.totalorder %s28, %s29
      %p43 = scmp.eq.s32.totalorder %s21, 1
      %p44 = por %p42, %p43
      %p46 = scmp.ne.s32.totalorder %s29, %s45
      %p47 = scmp.eq.s32.totalorder %s21, 0
      %p48 = por %p46, %p47
      %s50 = sadd.s32 %s49, 1
      %p53 = scmp.eq.s32.totalorder %s15, 1
      %p54 = scmp.ne.s32.totalorder %s49, %s51
      %p55 = scmp.eq.s32.totalorder %s15, 0
      %p56 = por %p54, %p55
      %p57 = scmp.ne.s32.totalorder %s49, %s51
      %p58 = scmp.eq.s32.totalorder %s20, 1
      %p59 = por %p57, %p58
      %p60 = scmp.ne.s32.totalorder %s51, %s52
      %p61 = scmp.eq.s32.totalorder %s20, 0
      %p62 = por %p60, %p61
      %p63 = scmp.ne.s32.totalorder %s51, %s52
      %p64 = scmp.eq.s32.totalorder %s21, 1
      %p65 = por %p63, %p64
      %p67 = scmp.ne.s32.totalorder %s52, %s66
      %p68 = scmp.eq.s32.totalorder %s21, 0
      %p69 = por %p67, %p68
      %s71 = sadd.s32 %s70, 1
      %p74 = scmp.eq.s32.totalorder %s15, 1
      %p75 = scmp.ne.s32.totalorder %s70, %s72
      %p76 = scmp.eq.s32.totalorder %s15, 0
      %p77 = por %p75, %p76
      %p78 = scmp.ne.s32.totalorder %s70, %s72
      %p79 = scmp.eq.s32.totalorder %s20, 1
      %p80 = por %p78, %p79
      %p81 = scmp.ne.s32.totalorder %s72, %s73
      %p82 = scmp.eq.s32.totalorder %s20, 0
      %p83 = por %p81, %p82
      %p84 = scmp.ne.s32.totalorder %s72, %s73
      %p85 = scmp.eq.s32.totalorder %s21, 1
      %p86 = por %p84, %p85
      %p88 = scmp.ne.s32.totalorder %s73, %s87
      %p89 = scmp.eq.s32.totalorder %s21, 0
      %p90 = por %p88, %p89
      %s91 = ssub.s32 %s15, %s22
      %p92 = scmp.eq.s32.totalorder %s91, 0
      %s94 = sadd.s32 %s93, 1
      %s95 = scalar_select %p92, %s93, %s94
      %p98 = pneg %p92
      %p99 = scmp.eq.s32.totalorder %s15, 1
      %p100 = por %p98, %p99
      %p101 = scmp.ne.s32.totalorder %s93, %s96
      %p102 = scmp.eq.s32.totalorder %s15, 0
      %p103 = por %p101, %p102
      %p104 = scmp.ne.s32.totalorder %s93, %s96
      %p105 = scmp.eq.s32.totalorder %s20, 1
      %p106 = por %p104, %p105
      %p107 = scmp.ne.s32.totalorder %s96, %s97
      %p108 = scmp.eq.s32.totalorder %s20, 0
      %p109 = por %p107, %p108
      %p110 = scmp.ne.s32.totalorder %s96, %s97
      %p111 = scmp.eq.s32.totalorder %s21, 1
      %p112 = por %p110, %p111
      %p114 = scmp.ne.s32.totalorder %s97, %s113
      %p115 = scmp.eq.s32.totalorder %s21, 0
      %p116 = por %p114, %p115
      %p117 = scmp.le.s32.totalorder 1, %s15
      %p118 = scmp.lt.s32.totalorder %s15, 3
      %p119 = pnand %p117, %p118
      %p120 = pneg %p119
      // Predicated region
      $region9: #{tpu_custom_call.1} parent=5 // pred_check
        _
      $region10: #{tpu_custom_call.1} parent=5 // pred_check_branch
        %122 = sbr.rel (%p119) target = $region12
      $region11: #{tpu_custom_call.1} parent=5 // pred_region
        %s123 = ssub.s32 %s15, 1
        // Predicated region
        $region13: #{tpu_custom_call.1} parent=11 // pred_check
          %p124 = pneg %p62
        $region14: #{tpu_custom_call.1} parent=11 // pred_check_branch
          %126 = sbr.rel (%p124) target = $region16
        $region15: #{tpu_custom_call.1} parent=11 // pred_region
          _
        $region16: #{tpu_custom_call.1} parent=11 // pred_fallthru
          _
        // Predicated region
        $region17: #{tpu_custom_call.1} parent=11 // pred_check
          %p127 = pneg %p83
        $region18: #{tpu_custom_call.1} parent=11 // pred_check_branch
          %129 = sbr.rel (%p127) target = $region20
        $region19: #{tpu_custom_call.1} parent=11 // pred_region
          _
        $region20: #{tpu_custom_call.1} parent=11 // pred_fallthru
          _
      $region12: #{tpu_custom_call.1} parent=5 // pred_fallthru
        _
      %p130 = scmp.lt.s32.totalorder %s15, 2
      // Predicated region
      $region21: #{tpu_custom_call.1} parent=5 // pred_check
        %p131 = pneg %p130
      $region22: #{tpu_custom_call.1} parent=5 // pred_check_branch
        %133 = sbr.rel (%p131) target = $region24
      $region23: #{tpu_custom_call.1} parent=5 // pred_region
        // Predicated region
        $region25: #{tpu_custom_call.1} parent=23 // pred_check
          %p134 = pneg %p35
        $region26: #{tpu_custom_call.1} parent=23 // pred_check_branch
          %136 = sbr.rel (%p134) target = $region28
        $region27: #{tpu_custom_call.1} parent=23 // pred_region
          %s137 = sand.u32 %s25, 1
          %s138 = scalar_lea.sflag [#allocation3], %s137
          %s139 = sand.u32 %s25, 1
          %s140 = smul.addr %s139, 128
          %s141 = scalar_lea.vmem [#allocation2], %s140
          %s142 = smul.u32 16, %s15
          %s144 = ssub.s32 2048, 2048
          %145 = vsyncadd %s138, %s144
          %s146 = smul.addr %s142, 128
          %s147 = scalar_lea.hbm %s0, %s146
          %s148 = sshll.u32 %s141, 4
          %s149 = int_to_ptr.vmem [resolvable:$true] %s148
          %154 = dma.hbm_to_vmem [thread:$0]  %s147, 2048, %s149, %s138, 128, 128, 8
        $region28: #{tpu_custom_call.1} parent=23 // pred_fallthru
          _
      $region24: #{tpu_custom_call.1} parent=5 // pred_fallthru
        _
      %p155 = scmp.le.s32.totalorder 1, %s15
      %p156 = scmp.lt.s32.totalorder %s15, 3
      %p157 = pnand %p155, %p156
      %p158 = pneg %p157
      // Predicated region
      $region29: #{tpu_custom_call.1} parent=5 // pred_check
        _
      $region30: #{tpu_custom_call.1} parent=5 // pred_check_branch
        %160 = sbr.rel (%p157) target = $region32
      $region31: #{tpu_custom_call.1} parent=5 // pred_region
        %s161 = ssub.s32 %s15, 1
        %s162 = sand.u32 %s28, 1
        %s163 = scalar_lea.sflag [#allocation3], %s162
        %s164 = sand.u32 %s28, 1
        %s165 = smul.addr %s164, 128
        %s166 = scalar_lea.vmem [#allocation2], %s165
        // Predicated region
        $region33: #{tpu_custom_call.1} parent=31 // pred_check
          %p167 = pneg %p41
        $region34: #{tpu_custom_call.1} parent=31 // pred_check_branch
          %169 = sbr.rel (%p167) target = $region36
        $region35: #{tpu_custom_call.1} parent=31 // pred_region
          %170 = dma.done %s163, 2048
        $region36: #{tpu_custom_call.1} parent=31 // pred_fallthru
          _
        %s171 = sand.u32 %s28, 1
        %s172 = scalar_lea.sflag [#allocation3], %s171
        %s173 = sand.u32 %s28, 1
        %s174 = smul.addr %s173, 128
        %s175 = scalar_lea.vmem [#allocation2], %s174
        %p176 = pneg %p41
        %p177 = pneg %p38
        %p178 = pneg %p62
        %p179 = pneg %p59
        %p180 = pneg %p83
        %p181 = pneg %p80
        %p182 = pneg %p109
        %p183 = pneg %p106
        %s184 = sand.u32 %s96, 1
        %s185 = scalar_lea.sflag [#allocation4], %s184
        %s186 = sand.u32 %s96, 1
        %s187 = smul.addr %s186, 128
        %s188 = scalar_lea.vmem [#allocation5], %s187
        %s189 = smul.u32 16, %s20
        %s190 = smul.u32 16, %s20
        %v192 = vld [vmem:[%s166] sm:$0xff]
        %v193 = vld [vmem:[%s166 + $0x8] sm:$0xff]
        %v194 = vld [vmem:[%s166 + $0x10] sm:$0xff]
        %v195 = vld [vmem:[%s166 + $0x18] sm:$0xff]
        %v196 = vld [vmem:[%s166 + $0x20] sm:$0xff]
        %v197 = vld [vmem:[%s166 + $0x28] sm:$0xff]
        %v198 = vld [vmem:[%s166 + $0x30] sm:$0xff]
        %v199 = vld [vmem:[%s166 + $0x38] sm:$0xff]
        %v200 = vld [vmem:[%s166 + $0x40] sm:$0xff]
        %v201 = vld [vmem:[%s166 + $0x48] sm:$0xff]
        %v202 = vld [vmem:[%s166 + $0x50] sm:$0xff]
        %v203 = vld [vmem:[%s166 + $0x58] sm:$0xff]
        %v204 = vld [vmem:[%s166 + $0x60] sm:$0xff]
        %v205 = vld [vmem:[%s166 + $0x68] sm:$0xff]
        %v206 = vld [vmem:[%s166 + $0x70] sm:$0xff]
        %v207 = vld [vmem:[%s166 + $0x78] sm:$0xff]
        %v208 = vpack.c.bf16 %v193, %v192
        %v209 = vpack.c.bf16 %v195, %v194
        %v210 = vpack.c.bf16 %v197, %v196
        %v211 = vpack.c.bf16 %v199, %v198
        %v212 = vpack.c.bf16 %v201, %v200
        %v213 = vpack.c.bf16 %v203, %v202
        %v214 = vpack.c.bf16 %v205, %v204
        %v215 = vpack.c.bf16 %v207, %v206
        %v216 = vld [vmem:[%s1] sm:$0xf]
        %v217 = vld [vmem:[%s1 + $0x4] sm:$0xf]
        %v218 = vld [vmem:[%s1 + $0x8] sm:$0xf]
        %v219 = vld [vmem:[%s1 + $0xc] sm:$0xf]
        %v220 = vld [vmem:[%s1 + $0x10] sm:$0xf]
        %v221 = vld [vmem:[%s1 + $0x14] sm:$0xf]
        %v222 = vld [vmem:[%s1 + $0x18] sm:$0xf]
        %v223 = vld [vmem:[%s1 + $0x1c] sm:$0xf]
        %v224 = vld [vmem:[%s1 + $0x20] sm:$0xf]
        %v225 = vld [vmem:[%s1 + $0x24] sm:$0xf]
        %v226 = vld [vmem:[%s1 + $0x28] sm:$0xf]
        %v227 = vld [vmem:[%s1 + $0x2c] sm:$0xf]
        %v228 = vld [vmem:[%s1 + $0x30] sm:$0xf]
        %v229 = vld [vmem:[%s1 + $0x34] sm:$0xf]
        %v230 = vld [vmem:[%s1 + $0x38] sm:$0xf]
        %v231 = vld [vmem:[%s1 + $0x3c] sm:$0xf]
        %v248 = vunpack.c.l.b16 %v216
        %v249 = vunpack.c.l.b16 %v217
        %v250 = vunpack.c.l.b16 %v218
        %v251 = vunpack.c.l.b16 %v219
        %v252 = vunpack.c.l.b16 %v220
        %v253 = vunpack.c.l.b16 %v221
        %v254 = vunpack.c.l.b16 %v222
        %v255 = vunpack.c.l.b16 %v223
        %v256 = vunpack.c.l.b16 %v224
        %v257 = vunpack.c.l.b16 %v225
        %v258 = vunpack.c.l.b16 %v226
        %v259 = vunpack.c.l.b16 %v227
        %v260 = vunpack.c.l.b16 %v228
        %v261 = vunpack.c.l.b16 %v229
        %v262 = vunpack.c.l.b16 %v230
        %v263 = vunpack.c.l.b16 %v231
        %v264 = vpack.c.b16 %v249, %v248
        %v265 = vpack.c.b16 %v251, %v250
        %v266 = vpack.c.b16 %v253, %v252
        %v267 = vpack.c.b16 %v255, %v254
        %v268 = vpack.c.b16 %v257, %v256
        %v269 = vpack.c.b16 %v259, %v258
        %v270 = vpack.c.b16 %v261, %v260
        %v271 = vpack.c.b16 %v263, %v262
        %280 = vmatprep.subr.bf16.mxu0 0
        %281 = vmatpush1.bf16.msra.mxu0 %v271
        %282 = vmatprep.subr.bf16.mxu0 0
        %283 = vmatpush1.bf16.msra.mxu0 %v270
        %284 = vmatprep.subr.bf16.mxu0 0
        %285 = vmatpush1.bf16.msra.mxu0 %v269
        %286 = vmatprep.subr.bf16.mxu0 0
        %287 = vmatpush1.bf16.msra.mxu0 %v268
        %288 = vmatprep.subr.bf16.mxu0 0
        %289 = vmatpush1.bf16.msra.mxu0 %v267
        %290 = vmatprep.subr.bf16.mxu0 0
        %291 = vmatpush1.bf16.msra.mxu0 %v266
        %292 = vmatprep.subr.bf16.mxu0 0
        %293 = vmatpush1.bf16.msra.mxu0 %v265
        %294 = vmatprep.subr.bf16.mxu0 0
        %295 = vmatpush1.bf16.msra.mxu0 %v264
        %296 = vmatprep.subr.bf16.mxu0 0
        %297 = vmatpush2.bf16.msra.mxu0 0
        %298 = vmatprep.subr.bf16.mxu0 0
        %299 = vmatpush2.bf16.msra.mxu0 0
        %300 = vmatprep.subr.bf16.mxu0 0
        %301 = vmatpush2.bf16.msra.mxu0 0
        %302 = vmatprep.subr.bf16.mxu0 0
        %303 = vmatpush2.bf16.msra.mxu0 0
        %304 = vmatprep.subr.bf16.mxu0 0
        %305 = vmatpush2.bf16.msra.mxu0 0
        %306 = vmatprep.subr.bf16.mxu0 0
        %307 = vmatpush2.bf16.msra.mxu0 0
        %308 = vmatprep.subr.bf16.mxu0 0
        %309 = vmatpush2.bf16.msra.mxu0 0
        %310 = vmatprep.subr.bf16.mxu0 0
        %311 = vmatpush2.bf16.msra.mxu0 0
        %312 = vmatprep.mubr.bf16.mxu0 0
        %313 = vmatmul.mubr.bf16.gmra.mxu0 %v208
        %v314 = vpop.f32.mrf.mxu0
        %v315 = vadd.f32 0.0, %v314
        %v316 = vpop.f32.mrf.mxu0
        %v317 = vpop.f32.mrf.mxu0
        %v318 = vadd.f32 0.0, %v317
        %v319 = vpop.f32.mrf.mxu0
        %320 = vmatprep.mubr.bf16.mxu0 0
        %321 = vmatmul.mubr.bf16.gmra.mxu0 %v209
        %v322 = vpop.f32.mrf.mxu0
        %v323 = vadd.f32 0.0, %v322
        %v324 = vpop.f32.mrf.mxu0
        %v325 = vpop.f32.mrf.mxu0
        %v326 = vadd.f32 0.0, %v325
        %v327 = vpop.f32.mrf.mxu0
        %328 = vmatprep.mubr.bf16.mxu0 0
        %329 = vmatmul.mubr.bf16.gmra.mxu0 %v210
        %v330 = vpop.f32.mrf.mxu0
        %v331 = vadd.f32 0.0, %v330
        %v332 = vpop.f32.mrf.mxu0
        %v333 = vpop.f32.mrf.mxu0
        %v334 = vadd.f32 0.0, %v333
        %v335 = vpop.f32.mrf.mxu0
        %336 = vmatprep.mubr.bf16.mxu0 0
        %337 = vmatmul.mubr.bf16.gmra.mxu0 %v211
        %v338 = vpop.f32.mrf.mxu0
        %v339 = vadd.f32 0.0, %v338
        %v340 = vpop.f32.mrf.mxu0
        %v341 = vpop.f32.mrf.mxu0
        %v342 = vadd.f32 0.0, %v341
        %v343 = vpop.f32.mrf.mxu0
        %344 = vmatprep.mubr.bf16.mxu0 0
        %345 = vmatmul.mubr.bf16.gmra.mxu0 %v212
        %v346 = vpop.f32.mrf.mxu0
        %v347 = vadd.f32 0.0, %v346
        %v348 = vpop.f32.mrf.mxu0
        %v349 = vpop.f32.mrf.mxu0
        %v350 = vadd.f32 0.0, %v349
        %v351 = vpop.f32.mrf.mxu0
        %352 = vmatprep.mubr.bf16.mxu0 0
        %353 = vmatmul.mubr.bf16.gmra.mxu0 %v213
        %v354 = vpop.f32.mrf.mxu0
        %v355 = vadd.f32 0.0, %v354
        %v356 = vpop.f32.mrf.mxu0
        %v357 = vpop.f32.mrf.mxu0
        %v358 = vadd.f32 0.0, %v357
        %v359 = vpop.f32.mrf.mxu0
        %360 = vmatprep.mubr.bf16.mxu0 0
        %361 = vmatmul.mubr.bf16.gmra.mxu0 %v214
        %v362 = vpop.f32.mrf.mxu0
        %v363 = vadd.f32 0.0, %v362
        %v364 = vpop.f32.mrf.mxu0
        %v365 = vpop.f32.mrf.mxu0
        %v366 = vadd.f32 0.0, %v365
        %v367 = vpop.f32.mrf.mxu0
        %368 = vmatprep.mubr.bf16.mxu0 0
        %369 = vmatmul.mubr.bf16.gmra.mxu0 %v215
        %v370 = vpop.f32.mrf.mxu0
        %v371 = vadd.f32 0.0, %v370
        %v372 = vpop.f32.mrf.mxu0
        %v373 = vpop.f32.mrf.mxu0
        %v374 = vadd.f32 0.0, %v373
        %v375 = vpop.f32.mrf.mxu0
        %376 = vdwg.mxu0
        %v377 = vpack.c.bf16 %v318, %v315
        %v378 = vpack.c.bf16 %v326, %v323
        %v379 = vpack.c.bf16 %v334, %v331
        %v380 = vpack.c.bf16 %v342, %v339
        %v381 = vpack.c.bf16 %v350, %v347
        %v382 = vpack.c.bf16 %v358, %v355
        %v383 = vpack.c.bf16 %v366, %v363
        %v384 = vpack.c.bf16 %v374, %v371
        %v385 = vld [vmem:[%s2] sm:$0xf]
        %v386 = vld [vmem:[%s2 + $0x4] sm:$0xf]
        %v387 = vld [vmem:[%s2 + $0x8] sm:$0xf]
        %v388 = vld [vmem:[%s2 + $0xc] sm:$0xf]
        %v393 = vunpack.c.l.b16 %v385
        %v394 = vunpack.c.l.b16 %v386
        %v395 = vunpack.c.l.b16 %v387
        %v396 = vunpack.c.l.b16 %v388
        %v397 = vpack.c.b16 %v394, %v393
        %v398 = vpack.c.b16 %v396, %v395
        %vm401 = vcmask 261120
        %v403 = vsel %vm401, %v377, 0
        %v406 = vsel %vm401, %v378, 0
        %v409 = vsel %vm401, %v379, 0
        %v412 = vsel %vm401, %v380, 0
        %v415 = vsel %vm401, %v381, 0
        %v418 = vsel %vm401, %v382, 0
        %v421 = vsel %vm401, %v383, 0
        %v424 = vsel %vm401, %v384, 0
        %426 = vmatprep.subr.bf16.mxu0 0
        %427 = vmatpush1.bf16.msra.mxu0 0
        %428 = vmatprep.subr.bf16.mxu0 0
        %429 = vmatpush1.bf16.msra.mxu0 0
        %430 = vmatprep.subr.bf16.mxu0 0
        %431 = vmatpush1.bf16.msra.mxu0 0
        %432 = vmatprep.subr.bf16.mxu0 0
        %433 = vmatpush1.bf16.msra.mxu0 0
        %434 = vmatprep.subr.bf16.mxu0 0
        %435 = vmatpush1.bf16.msra.mxu0 0
        %436 = vmatprep.subr.bf16.mxu0 0
        %437 = vmatpush1.bf16.msra.mxu0 0
        %438 = vmatprep.subr.bf16.mxu0 0
        %439 = vmatpush1.bf16.msra.mxu0 %v398
        %440 = vmatprep.subr.bf16.mxu0 0
        %441 = vmatpush1.bf16.msra.mxu0 %v397
        %442 = vmatprep.subr.bf16.mxu0 0
        %443 = vmatpush2.bf16.msra.mxu0 0
        %444 = vmatprep.subr.bf16.mxu0 0
        %445 = vmatpush2.bf16.msra.mxu0 0
        %446 = vmatprep.subr.bf16.mxu0 0
        %447 = vmatpush2.bf16.msra.mxu0 0
        %448 = vmatprep.subr.bf16.mxu0 0
        %449 = vmatpush2.bf16.msra.mxu0 0
        %450 = vmatprep.subr.bf16.mxu0 0
        %451 = vmatpush2.bf16.msra.mxu0 0
        %452 = vmatprep.subr.bf16.mxu0 0
        %453 = vmatpush2.bf16.msra.mxu0 0
        %454 = vmatprep.subr.bf16.mxu0 0
        %455 = vmatpush2.bf16.msra.mxu0 0
        %456 = vmatprep.subr.bf16.mxu0 0
        %457 = vmatpush2.bf16.msra.mxu0 0
        %458 = vmatprep.mubr.bf16.mxu0 0
        %459 = vmatmul.mubr.bf16.gmra.mxu0 %v403
        %v460 = vpop.f32.mrf.mxu0
        %v461 = vadd.f32 0.0, %v460
        %v462 = vpop.f32.mrf.mxu0
        %v463 = vpop.f32.mrf.mxu0
        %v464 = vadd.f32 0.0, %v463
        %v465 = vpop.f32.mrf.mxu0
        %466 = vmatprep.mubr.bf16.mxu0 0
        %467 = vmatmul.mubr.bf16.gmra.mxu0 %v406
        %v468 = vpop.f32.mrf.mxu0
        %v469 = vadd.f32 0.0, %v468
        %v470 = vpop.f32.mrf.mxu0
        %v471 = vpop.f32.mrf.mxu0
        %v472 = vadd.f32 0.0, %v471
        %v473 = vpop.f32.mrf.mxu0
        %474 = vmatprep.mubr.bf16.mxu0 0
        %475 = vmatmul.mubr.bf16.gmra.mxu0 %v409
        %v476 = vpop.f32.mrf.mxu0
        %v477 = vadd.f32 0.0, %v476
        %v478 = vpop.f32.mrf.mxu0
        %v479 = vpop.f32.mrf.mxu0
        %v480 = vadd.f32 0.0, %v479
        %v481 = vpop.f32.mrf.mxu0
        %482 = vmatprep.mubr.bf16.mxu0 0
        %483 = vmatmul.mubr.bf16.gmra.mxu0 %v412
        %v484 = vpop.f32.mrf.mxu0
        %v485 = vadd.f32 0.0, %v484
        %v486 = vpop.f32.mrf.mxu0
        %v487 = vpop.f32.mrf.mxu0
        %v488 = vadd.f32 0.0, %v487
        %v489 = vpop.f32.mrf.mxu0
        %490 = vmatprep.mubr.bf16.mxu0 0
        %491 = vmatmul.mubr.bf16.gmra.mxu0 %v415
        %v492 = vpop.f32.mrf.mxu0
        %v493 = vadd.f32 0.0, %v492
        %v494 = vpop.f32.mrf.mxu0
        %v495 = vpop.f32.mrf.mxu0
        %v496 = vadd.f32 0.0, %v495
        %v497 = vpop.f32.mrf.mxu0
        %498 = vmatprep.mubr.bf16.mxu0 0
        %499 = vmatmul.mubr.bf16.gmra.mxu0 %v418
        %v500 = vpop.f32.mrf.mxu0
        %v501 = vadd.f32 0.0, %v500
        %v502 = vpop.f32.mrf.mxu0
        %v503 = vpop.f32.mrf.mxu0
        %v504 = vadd.f32 0.0, %v503
        %v505 = vpop.f32.mrf.mxu0
        %506 = vmatprep.mubr.bf16.mxu0 0
        %507 = vmatmul.mubr.bf16.gmra.mxu0 %v421
        %v508 = vpop.f32.mrf.mxu0
        %v509 = vadd.f32 0.0, %v508
        %v510 = vpop.f32.mrf.mxu0
        %v511 = vpop.f32.mrf.mxu0
        %v512 = vadd.f32 0.0, %v511
        %v513 = vpop.f32.mrf.mxu0
        %514 = vmatprep.mubr.bf16.mxu0 0
        %515 = vmatmul.mubr.bf16.gmra.mxu0 %v424
        %v516 = vpop.f32.mrf.mxu0
        %v517 = vadd.f32 0.0, %v516
        %v518 = vpop.f32.mrf.mxu0
        %v519 = vpop.f32.mrf.mxu0
        %v520 = vadd.f32 0.0, %v519
        %v521 = vpop.f32.mrf.mxu0
        %522 = vdwg.mxu0
        %523 = vmax.xlane.f32.xlu0 %v461
        %v524 = vpop.xlane.xlu0 %523
        %525 = vmax.xlane.f32.xlu0 %v464
        %v526 = vpop.xlane.xlu0 %525
        %527 = vmax.xlane.f32.xlu0 %v469
        %v528 = vpop.xlane.xlu0 %527
        %529 = vmax.xlane.f32.xlu0 %v472
        %v530 = vpop.xlane.xlu0 %529
        %531 = vmax.xlane.f32.xlu0 %v477
        %v532 = vpop.xlane.xlu0 %531
        %533 = vmax.xlane.f32.xlu0 %v480
        %v534 = vpop.xlane.xlu0 %533
        %535 = vmax.xlane.f32.xlu0 %v485
        %v536 = vpop.xlane.xlu0 %535
        %537 = vmax.xlane.f32.xlu0 %v488
        %v538 = vpop.xlane.xlu0 %537
        %539 = vmax.xlane.f32.xlu0 %v493
        %v540 = vpop.xlane.xlu0 %539
        %541 = vmax.xlane.f32.xlu0 %v496
        %v542 = vpop.xlane.xlu0 %541
        %543 = vmax.xlane.f32.xlu0 %v501
        %v544 = vpop.xlane.xlu0 %543
        %545 = vmax.xlane.f32.xlu0 %v504
        %v546 = vpop.xlane.xlu0 %545
        %547 = vmax.xlane.f32.xlu0 %v509
        %v548 = vpop.xlane.xlu0 %547
        %549 = vmax.xlane.f32.xlu0 %v512
        %v550 = vpop.xlane.xlu0 %549
        %551 = vmax.xlane.f32.xlu0 %v517
        %v552 = vpop.xlane.xlu0 %551
        %553 = vmax.xlane.f32.xlu0 %v520
        %v554 = vpop.xlane.xlu0 %553
        %v555 = vsub.f32 %v461, %v524
        %v556 = vsub.f32 %v464, %v526
        %v557 = vsub.f32 %v469, %v528
        %v558 = vsub.f32 %v472, %v530
        %v559 = vsub.f32 %v477, %v532
        %v560 = vsub.f32 %v480, %v534
        %v561 = vsub.f32 %v485, %v536
        %v562 = vsub.f32 %v488, %v538
        %v563 = vsub.f32 %v493, %v540
        %v564 = vsub.f32 %v496, %v542
        %v565 = vsub.f32 %v501, %v544
        %v566 = vsub.f32 %v504, %v546
        %v567 = vsub.f32 %v509, %v548
        %v568 = vsub.f32 %v512, %v550
        %v569 = vsub.f32 %v517, %v552
        %v570 = vsub.f32 %v520, %v554
        %v571 = vmul.f32 %v555, 1.442695
        %v572 = vpow.pop %v571
        %v573 = vmul.f32 %v556, 1.442695
        %v574 = vpow.pop %v573
        %v575 = vmul.f32 %v557, 1.442695
        %v576 = vpow.pop %v575
        %v577 = vmul.f32 %v558, 1.442695
        %v578 = vpow.pop %v577
        %v579 = vmul.f32 %v559, 1.442695
        %v580 = vpow.pop %v579
        %v581 = vmul.f32 %v560, 1.442695
        %v582 = vpow.pop %v581
        %v583 = vmul.f32 %v561, 1.442695
        %v584 = vpow.pop %v583
        %v585 = vmul.f32 %v562, 1.442695
        %v586 = vpow.pop %v585
        %v587 = vmul.f32 %v563, 1.442695
        %v588 = vpow.pop %v587
        %v589 = vmul.f32 %v564, 1.442695
        %v590 = vpow.pop %v589
        %v591 = vmul.f32 %v565, 1.442695
        %v592 = vpow.pop %v591
        %v593 = vmul.f32 %v566, 1.442695
        %v594 = vpow.pop %v593
        %v595 = vmul.f32 %v567, 1.442695
        %v596 = vpow.pop %v595
        %v597 = vmul.f32 %v568, 1.442695
        %v598 = vpow.pop %v597
        %v599 = vmul.f32 %v569, 1.442695
        %v600 = vpow.pop %v599
        %v601 = vmul.f32 %v570, 1.442695
        %v602 = vpow.pop %v601
        %603 = vadd.xlane.f32.xlu0 %v572
        %v604 = vpop.xlane.xlu0 %603
        %605 = vadd.xlane.f32.xlu0 %v574
        %v606 = vpop.xlane.xlu0 %605
        %607 = vadd.xlane.f32.xlu0 %v576
        %v608 = vpop.xlane.xlu0 %607
        %609 = vadd.xlane.f32.xlu0 %v578
        %v610 = vpop.xlane.xlu0 %609
        %611 = vadd.xlane.f32.xlu0 %v580
        %v612 = vpop.xlane.xlu0 %611
        %613 = vadd.xlane.f32.xlu0 %v582
        %v614 = vpop.xlane.xlu0 %613
        %615 = vadd.xlane.f32.xlu0 %v584
        %v616 = vpop.xlane.xlu0 %615
        %617 = vadd.xlane.f32.xlu0 %v586
        %v618 = vpop.xlane.xlu0 %617
        %619 = vadd.xlane.f32.xlu0 %v588
        %v620 = vpop.xlane.xlu0 %619
        %621 = vadd.xlane.f32.xlu0 %v590
        %v622 = vpop.xlane.xlu0 %621
        %623 = vadd.xlane.f32.xlu0 %v592
        %v624 = vpop.xlane.xlu0 %623
        %625 = vadd.xlane.f32.xlu0 %v594
        %v626 = vpop.xlane.xlu0 %625
        %627 = vadd.xlane.f32.xlu0 %v596
        %v628 = vpop.xlane.xlu0 %627
        %629 = vadd.xlane.f32.xlu0 %v598
        %v630 = vpop.xlane.xlu0 %629
        %631 = vadd.xlane.f32.xlu0 %v600
        %v632 = vpop.xlane.xlu0 %631
        %633 = vadd.xlane.f32.xlu0 %v602
        %v634 = vpop.xlane.xlu0 %633
        %v635 = vrcp.pop %v604
        %v636 = vmul.f32 %v572, %v635
        %v637 = vrcp.pop %v606
        %v638 = vmul.f32 %v574, %v637
        %v639 = vrcp.pop %v608
        %v640 = vmul.f32 %v576, %v639
        %v641 = vrcp.pop %v610
        %v642 = vmul.f32 %v578, %v641
        %v643 = vrcp.pop %v612
        %v644 = vmul.f32 %v580, %v643
        %v645 = vrcp.pop %v614
        %v646 = vmul.f32 %v582, %v645
        %v647 = vrcp.pop %v616
        %v648 = vmul.f32 %v584, %v647
        %v649 = vrcp.pop %v618
        %v650 = vmul.f32 %v586, %v649
        %v651 = vrcp.pop %v620
        %v652 = vmul.f32 %v588, %v651
        %v653 = vrcp.pop %v622
        %v654 = vmul.f32 %v590, %v653
        %v655 = vrcp.pop %v624
        %v656 = vmul.f32 %v592, %v655
        %v657 = vrcp.pop %v626
        %v658 = vmul.f32 %v594, %v657
        %v659 = vrcp.pop %v628
        %v660 = vmul.f32 %v596, %v659
        %v661 = vrcp.pop %v630
        %v662 = vmul.f32 %v598, %v661
        %v663 = vrcp.pop %v632
        %v664 = vmul.f32 %v600, %v663
        %v665 = vrcp.pop %v634
        %v666 = vmul.f32 %v602, %v665
        %667 = vst [vmem:[%s188] sm:$0xff] %v636
        %668 = vst [vmem:[%s188 + $0x8] sm:$0xff] %v638
        %669 = vst [vmem:[%s188 + $0x10] sm:$0xff] %v640
        %670 = vst [vmem:[%s188 + $0x18] sm:$0xff] %v642
        %671 = vst [vmem:[%s188 + $0x20] sm:$0xff] %v644
        %672 = vst [vmem:[%s188 + $0x28] sm:$0xff] %v646
        %673 = vst [vmem:[%s188 + $0x30] sm:$0xff] %v648
        %674 = vst [vmem:[%s188 + $0x38] sm:$0xff] %v650
        %675 = vst [vmem:[%s188 + $0x40] sm:$0xff] %v652
        %676 = vst [vmem:[%s188 + $0x48] sm:$0xff] %v654
        %677 = vst [vmem:[%s188 + $0x50] sm:$0xff] %v656
        %678 = vst [vmem:[%s188 + $0x58] sm:$0xff] %v658
        %679 = vst [vmem:[%s188 + $0x60] sm:$0xff] %v660
        %680 = vst [vmem:[%s188 + $0x68] sm:$0xff] %v662
        %681 = vst [vmem:[%s188 + $0x70] sm:$0xff] %v664
        %682 = vst [vmem:[%s188 + $0x78] sm:$0xff] %v666
        %s683 = sand.u32 %s96, 1
        %s684 = scalar_lea.sflag [#allocation4], %s683
        %s685 = sand.u32 %s96, 1
        %s686 = smul.addr %s685, 128
        %s687 = scalar_lea.vmem [#allocation5], %s686
        // Predicated region
        $region37: #{tpu_custom_call.1} parent=31 // pred_check
          %p688 = pneg %p106
        $region38: #{tpu_custom_call.1} parent=31 // pred_check_branch
          %690 = sbr.rel (%p688) target = $region40
        $region39: #{tpu_custom_call.1} parent=31 // pred_region
          %s691 = smul.u32 16, %s20
          %s693 = ssub.s32 2048, 2048
          %694 = vsyncadd %s684, %s693
          %s695 = smul.addr %s691, 128
          %s696 = scalar_lea.hbm %s3, %s695
          %s697 = sshll.u32 %s687, 4
          %s698 = int_to_ptr.vmem [resolvable:$true] %s697
          %703 = dma.vmem_to_hbm [thread:$0]  %s698, 2048, %s696, %s684, 128, 128, 8
        $region40: #{tpu_custom_call.1} parent=31 // pred_fallthru
          _
      $region32: #{tpu_custom_call.1} parent=5 // pred_fallthru
        _
      %p704 = scmp.le.s32.totalorder 2, %s15
      // Predicated region
      $region41: #{tpu_custom_call.1} parent=5 // pred_check
        %p705 = pneg %p704
      $region42: #{tpu_custom_call.1} parent=5 // pred_check_branch
        %707 = sbr.rel (%p705) target = $region44
      $region43: #{tpu_custom_call.1} parent=5 // pred_region
        %s708 = ssub.s32 %s15, 2
        // Predicated region
        $region45: #{tpu_custom_call.1} parent=43 // pred_check
          %p709 = pneg %p112
        $region46: #{tpu_custom_call.1} parent=43 // pred_check_branch
          %711 = sbr.rel (%p709) target = $region48
        $region47: #{tpu_custom_call.1} parent=43 // pred_region
          %s712 = sand.u32 %s97, 1
          %s713 = scalar_lea.sflag [#allocation4], %s712
          %s714 = sand.u32 %s97, 1
          %s715 = smul.addr %s714, 128
          %s716 = scalar_lea.vmem [#allocation5], %s715
          %717 = dma.done %s713, 2048
        $region48: #{tpu_custom_call.1} parent=43 // pred_fallthru
          _
      $region44: #{tpu_custom_call.1} parent=5 // pred_fallthru
        _
    $region6: #{tpu_custom_call.1} parent=1 // loop_footer
      %s19 = sadd.s32 1, %s15
    $region7: #{tpu_custom_call.1} parent=1 // loop_footer_branch
      %14 = sbr.rel target = $region3
    $region8: #{tpu_custom_call.1} parent=1 // loop_exit
      _
    %718 = vsyncpa [#allocation3], 1
    %s719 = scalar_lea.sflag [#allocation3], 1
    %720 = vsyncpa %s719, 1
    %721 = vsyncpa [#allocation4], 1
    %s722 = scalar_lea.sflag [#allocation4], 1
    %723 = vsyncpa %s722, 1

</llo_original>
